<compile_context>
chip_gen: v7x
topology: tpu7x:2x2x1
jax: 0.10.0
libtpu: 0.0.40
codegen_flags: <defaults>
</compile_context>

<pallas_src>
import jax
import jax.numpy as jnp
import numpy as np
from jax.experimental import pallas as pl
from jax.experimental.pallas import tpu as pltpu

EPS = 1e-8


def _gvp_kernel(s_ref, v_ref, wc_ref, ws_s_ref, ws_vn_ref, wsb_ref,
                s_out_ref, v_out_ref):
    # s_ref:    (si, TN)            v_ref:    (3, vi, TN)   [N on lanes]
    # wc_ref:   (h+vo, vi)   rows 0:h = Wh, rows h: = Wv @ Wh  (folded)
    # ws_s_ref: (so, si)     ws_vn_ref: (so, h)     wsb_ref: (so, 1)
    # s_out_ref:(so, TN)            v_out_ref:(3, vo, TN)
    h = ws_vn_ref.shape[1]

    # One fused (Wh & Wv) matmul per xyz component.  K = vi fits a single MXU
    # K-tile; results land feature-major x lane-dense (h+vo, TN) in f32.
    wc = wc_ref[...]
    r0 = jnp.dot(wc, v_ref[0], preferred_element_type=jnp.float32)
    r1 = jnp.dot(wc, v_ref[1], preferred_element_type=jnp.float32)
    r2 = jnp.dot(wc, v_ref[2], preferred_element_type=jnp.float32)

    # vn = ||vh||_2 over xyz, clamped at eps (matches _norm_no_nan).
    # Sublane slices at 0:h / h: are whole-vreg selects when h % 8 == 0.
    vh0, vh1, vh2 = r0[:h], r1[:h], r2[:h]
    vn = jnp.sqrt(jnp.maximum(vh0 * vh0 + vh1 * vh1 + vh2 * vh2, EPS))  # (h,TN)

    # Scalar path: Ws([s, vn]) via pre-split weights (no in-kernel concat).
    s_lin = (jnp.dot(ws_s_ref[...], s_ref[...],
                     preferred_element_type=jnp.float32)
             + jnp.dot(ws_vn_ref[...], vn.astype(ws_vn_ref.dtype),
                       preferred_element_type=jnp.float32)
             + wsb_ref[...])                                    # (so, TN)
    s_out_ref[...] = jnp.maximum(s_lin, 0.0).astype(s_out_ref.dtype)

    # Vector path (no vector gate): v = vpre * sigmoid(||vpre||_2 over xyz).
    p0, p1, p2 = r0[h:], r1[h:], r2[h:]
    vnorm = jnp.sqrt(jnp.maximum(p0 * p0 + p1 * p1 + p2 * p2, EPS))    # (vo,TN)
    gate = jax.nn.sigmoid(vnorm)                                # EUP path, f32
    v_out_ref[0] = (p0 * gate).astype(v_out_ref.dtype)
    v_out_ref[1] = (p1 * gate).astype(v_out_ref.dtype)
    v_out_ref[2] = (p2 * gate).astype(v_out_ref.dtype)


def _pick_tile(n, max_tile):
    """Lane-axis tile: multiple of 128; >=2 grid steps when there is enough
    work so the 'parallel' axis can span both TensorCores on v7x."""
    n_up = ((n + 127) // 128) * 128
    tn = min(int(max_tile), n_up)
    tn = max((tn // 128) * 128, 128)
    if tn >= n and n_up >= 2 * 128:
        tn = ((n_up // 2 + 127) // 128) * 128
    return tn


def _prep_weights(params, si, dtype):
    """Fold Wh/Wv, split Ws, cast weights to the storage dtype (tiny arrays)."""
    wh = params["wh"]                                   # (h, vi)
    wv = params["wv"]                                   # (vo, h)
    ws_w = params["ws_w"]                               # (so, si + h)
    wc = jnp.concatenate([wh, wv @ wh], axis=0).astype(dtype)   # (h+vo, vi)
    ws_s = ws_w[:, :si].astype(dtype)                   # (so, si)
    ws_vn = ws_w[:, si:].astype(dtype)                  # (so, h)
    wsb = params["ws_b"].reshape(-1, 1).astype(jnp.float32)     # (so, 1)
    return wc, ws_s, ws_vn, wsb


def gvp_forward_cm(s_cm, v_cm, params, *, max_tile=2048, out_dtype=None):
    """Native (lane-dense, component-major) entry point.

    s_cm: (si, N), v_cm: (3, vi, N)  ->  (s_out (so, N), v_out (3, vo, N)).
    Storage dtype follows the inputs (f32 or bf16); accumulation is f32.
    """
    si, n = s_cm.shape
    assert v_cm.shape[0] == 3 and v_cm.shape[2] == n, "v_cm must be (3, vi, N)"
    dtype = s_cm.dtype
    v_cm = v_cm.astype(dtype)
    out_dtype = out_dtype or dtype

    wc, ws_s, ws_vn, wsb = _prep_weights(params, si, dtype)
    hvo, vi = wc.shape
    h = ws_vn.shape[1]
    so = ws_s.shape[0]
    vo = hvo - h

    tn = _pick_tile(n, max_tile)
    grid = (pl.cdiv(n, tn),)

    s_out, v_out = pl.pallas_call(
        _gvp_kernel,
        grid=grid,
        in_specs=[
            pl.BlockSpec((si, tn), lambda i: (0, i)),
            pl.BlockSpec((3, vi, tn), lambda i: (0, 0, i)),
            pl.BlockSpec((hvo, vi), lambda i: (0, 0)),    # weights pinned
            pl.BlockSpec((so, si), lambda i: (0, 0)),
            pl.BlockSpec((so, h), lambda i: (0, 0)),
            pl.BlockSpec((so, 1), lambda i: (0, 0)),
        ],
        out_specs=[
            pl.BlockSpec((so, tn), lambda i: (0, i)),
            pl.BlockSpec((3, vo, tn), lambda i: (0, 0, i)),
        ],
        out_shape=[
            jax.ShapeDtypeStruct((so, n), out_dtype),
            jax.ShapeDtypeStruct((3, vo, n), out_dtype),
        ],
        compiler_params=pltpu.CompilerParams(
            dimension_semantics=("parallel",),
            vmem_limit_bytes=32 * 1024 * 1024),
    )(s_cm, v_cm, wc, ws_s, ws_vn, wsb)
    return s_out, v_out


def gvp_forward(s, v, params, **kwargs):
    """Module-layout shim: s (N, si), v (N, vi, 3) -> (s (N, so), v (N, vo, 3)).

    NOTE: the four transposes here are full HBM round trips of the
    activations; production code should have the producer/consumer use the
    component-major, lane-dense layout of `gvp_forward_cm` directly.
    """
    s_cm = jnp.transpose(s)                       # (si, N)
    v_cm = jnp.transpose(v, (2, 1, 0))            # (3, vi, N)
    s_out_cm, v_out_cm = gvp_forward_cm(s_cm, v_cm, params, **kwargs)
    return jnp.transpose(s_out_cm), jnp.transpose(v_out_cm, (2, 1, 0))


def gvp_reference(s, v, params):
    """Pure-JAX port of the PyTorch forward (vi>0, vo>0, no vector gate)."""
    vt = jnp.swapaxes(v, -1, -2)                       # (N, 3, vi)
    vh = vt @ params["wh"].T                           # (N, 3, h)
    vn = jnp.sqrt(jnp.maximum(jnp.sum(vh * vh, axis=-2), EPS))  # (N, h)
    sc = jnp.concatenate([s, vn], axis=-1)
    s_out = sc @ params["ws_w"].T + params["ws_b"]
    vout = vh @ params["wv"].T                         # (N, 3, vo)
    vout = jnp.swapaxes(vout, -1, -2)                  # (N, vo, 3)
    vnorm = jnp.sqrt(jnp.maximum(jnp.sum(vout * vout, axis=-1, keepdims=True),
                                 EPS))
    vout = vout * jax.nn.sigmoid(vnorm)
    s_out = jax.nn.relu(s_out)
    return s_out, vout


if __name__ == "__main__":
    # Small, module-consistent shapes: in_dims=(32, 16), out_dims=(32, 16),
    # h_dim = max(vi, vo) = 16, N = 256 nodes.
    N, si, vi, so, vo = 256, 32, 16, 32, 16
    h = max(vi, vo)

    key = jax.random.PRNGKey(0)
    k_s, k_v, k_wh, k_wsw, k_wsb, k_wv = jax.random.split(key, 6)

    # The "producer" emits component-major / lane-dense activations directly.
    s_cm = jax.random.normal(k_s, (si, N), dtype=jnp.float32)       # (si, N)
    v_cm = jax.random.normal(k_v, (3, vi, N), dtype=jnp.float32)    # (3, vi, N)

    # torch.nn.Linear convention: weight shape = (out_features, in_features).
    # ws_w columns: first si act on s, last h act on vn (cat([s, vn])).
    params = {
        "wh": 0.3 * jax.random.normal(k_wh, (h, vi), dtype=jnp.float32),
        "ws_w": 0.2 * jax.random.normal(k_wsw, (so, si + h), dtype=jnp.float32),
        "ws_b": 0.1 * jax.random.normal(k_wsb, (so,), dtype=jnp.float32),
        "wv": 0.3 * jax.random.normal(k_wv, (vo, h), dtype=jnp.float32),
    }

    # --- f32 kernel, native layout ---------------------------------------
    s_out_cm, v_out_cm = gvp_forward_cm(s_cm, v_cm, params)
    jax.block_until_ready((s_out_cm, v_out_cm))

    # Reference in the PyTorch (N, si) / (N, vi, 3) layout.
    s_nm = jnp.transpose(s_cm)                      # (N, si)
    v_nm = jnp.transpose(v_cm, (2, 1, 0))           # (N, vi, 3)
    s_ref, v_ref = gvp_reference(s_nm, v_nm, params)

    np.testing.assert_allclose(np.asarray(jnp.transpose(s_out_cm)),
                               np.asarray(s_ref), rtol=1e-4, atol=1e-5)
    np.testing.assert_allclose(np.asarray(jnp.transpose(v_out_cm, (2, 1, 0))),
                               np.asarray(v_ref), rtol=1e-4, atol=1e-5)

    # --- bf16-storage kernel (f32 accumulation / norms / sigmoid) ---------
    s_out_bf, v_out_bf = gvp_forward_cm(s_cm.astype(jnp.bfloat16),
                                        v_cm.astype(jnp.bfloat16), params)
    jax.block_until_ready((s_out_bf, v_out_bf))
    np.testing.assert_allclose(
        np.asarray(jnp.transpose(s_out_bf).astype(jnp.float32)),
        np.asarray(s_ref), rtol=8e-2, atol=8e-2)
    np.testing.assert_allclose(
        np.asarray(jnp.transpose(v_out_bf, (2, 1, 0)).astype(jnp.float32)),
        np.asarray(v_ref), rtol=8e-2, atol=8e-2)

    # --- Module-layout compatibility shim ---------------------------------
    s_out_nm, v_out_nm = gvp_forward(s_nm, v_nm, params)
    jax.block_until_ready((s_out_nm, v_out_nm))
    np.testing.assert_allclose(np.asarray(s_out_nm), np.asarray(s_ref),
                               rtol=1e-4, atol=1e-5)
    np.testing.assert_allclose(np.asarray(v_out_nm), np.asarray(v_ref),
                               rtol=1e-4, atol=1e-5)

    # TODO(synk): the vi==0 / vo==0 / vector_gate=True branches of GVP are not
    # kernelized here; only the default (vi>0, vo>0, no gate) path is.
    print("KERNEL_OK")
</pallas_src>

<mosaic_0001>
module attributes {stable_mosaic.version = 11 : i64} {
  func.func @_gvp_kernel(%arg0: i32, %arg1: memref<32x128xf32, #tpu.memory_space<vmem>>, %arg2: memref<3x16x128xf32, #tpu.memory_space<vmem>>, %arg3: memref<32x16xf32, #tpu.memory_space<vmem>>, %arg4: memref<32x32xf32, #tpu.memory_space<vmem>>, %arg5: memref<32x16xf32, #tpu.memory_space<vmem>>, %arg6: memref<32x1xf32, #tpu.memory_space<vmem>>, %arg7: memref<32x128xf32, #tpu.memory_space<vmem>>, %arg8: memref<3x16x128xf32, #tpu.memory_space<vmem>>) attributes {dimension_semantics = [#tpu.dimension_semantics<parallel>], iteration_bounds = array<i64: 2>, scalar_prefetch = 0 : i64, scratch_operands = 0 : i64, tpu.core_type = #tpu.core_type<tc>, window_params = [{transform_indices = @transform_0, window_bounds = array<i64: 32, 128>}, {transform_indices = @transform_1, window_bounds = array<i64: 3, 16, 128>}, {pipeline_mode = #tpu.pipeline_mode<synchronous>, transform_indices = @transform_2, window_bounds = array<i64: 32, 16>}, {pipeline_mode = #tpu.pipeline_mode<synchronous>, transform_indices = @transform_3, window_bounds = array<i64: 32, 32>}, {pipeline_mode = #tpu.pipeline_mode<synchronous>, transform_indices = @transform_4, window_bounds = array<i64: 32, 16>}, {pipeline_mode = #tpu.pipeline_mode<synchronous>, transform_indices = @transform_5, window_bounds = array<i64: 32, 1>}, {transform_indices = @transform_6, window_bounds = array<i64: 32, 128>}, {transform_indices = @transform_7, window_bounds = array<i64: 3, 16, 128>}]} {
    %c0 = arith.constant 0 : index
    %c0_0 = arith.constant 0 : index
    %0 = vector.load %arg3[%c0, %c0_0] : memref<32x16xf32, #tpu.memory_space<vmem>>, vector<32x16xf32>
    %c0_1 = arith.constant 0 : index
    %c0_2 = arith.constant 0 : index
    %c0_3 = arith.constant 0 : index
    %1 = vector.load %arg2[%c0_1, %c0_2, %c0_3] : memref<3x16x128xf32, #tpu.memory_space<vmem>>, vector<1x16x128xf32>
    %2 = vector.shape_cast %1 : vector<1x16x128xf32> to vector<16x128xf32>
    %cst = arith.constant dense<0.000000e+00> : vector<32x128xf32>
    %3 = tpu.matmul %0, %2, %cst {dimension_numbers = #tpu.dot_dimension_numbers<[1], [0], [0], [1], [0, 0, 1, 1], [], []>} : vector<32x16xf32>, vector<16x128xf32>, vector<32x128xf32> -> vector<32x128xf32>
    %c1 = arith.constant 1 : index
    %c0_4 = arith.constant 0 : index
    %c0_5 = arith.constant 0 : index
    %4 = vector.load %arg2[%c1, %c0_4, %c0_5] : memref<3x16x128xf32, #tpu.memory_space<vmem>>, vector<1x16x128xf32>
    %5 = vector.shape_cast %4 : vector<1x16x128xf32> to vector<16x128xf32>
    %cst_6 = arith.constant dense<0.000000e+00> : vector<32x128xf32>
    %6 = tpu.matmul %0, %5, %cst_6 {dimension_numbers = #tpu.dot_dimension_numbers<[1], [0], [0], [1], [0, 0, 1, 1], [], []>} : vector<32x16xf32>, vector<16x128xf32>, vector<32x128xf32> -> vector<32x128xf32>
    %c2 = arith.constant 2 : index
    %c0_7 = arith.constant 0 : index
    %c0_8 = arith.constant 0 : index
    %7 = vector.load %arg2[%c2, %c0_7, %c0_8] : memref<3x16x128xf32, #tpu.memory_space<vmem>>, vector<1x16x128xf32>
    %8 = vector.shape_cast %7 : vector<1x16x128xf32> to vector<16x128xf32>
    %cst_9 = arith.constant dense<0.000000e+00> : vector<32x128xf32>
    %9 = tpu.matmul %0, %8, %cst_9 {dimension_numbers = #tpu.dot_dimension_numbers<[1], [0], [0], [1], [0, 0, 1, 1], [], []>} : vector<32x16xf32>, vector<16x128xf32>, vector<32x128xf32> -> vector<32x128xf32>
    %10 = vector.extract_strided_slice %3 {offsets = [0, 0], sizes = [16, 128], strides = [1, 1]} : vector<32x128xf32> to vector<16x128xf32>
    %11 = vector.extract_strided_slice %6 {offsets = [0, 0], sizes = [16, 128], strides = [1, 1]} : vector<32x128xf32> to vector<16x128xf32>
    %12 = vector.extract_strided_slice %9 {offsets = [0, 0], sizes = [16, 128], strides = [1, 1]} : vector<32x128xf32> to vector<16x128xf32>
    %13 = arith.mulf %10, %10 : vector<16x128xf32>
    %14 = arith.mulf %11, %11 : vector<16x128xf32>
    %15 = arith.addf %13, %14 : vector<16x128xf32>
    %16 = arith.mulf %12, %12 : vector<16x128xf32>
    %17 = arith.addf %15, %16 : vector<16x128xf32>
    %cst_10 = arith.constant 9.99999993E-9 : f32
    %18 = vector.broadcast %cst_10 : f32 to vector<16x128xf32>
    %19 = arith.maximumf %17, %18 : vector<16x128xf32>
    %20 = math.sqrt %19 : vector<16x128xf32>
    %c0_11 = arith.constant 0 : index
    %c0_12 = arith.constant 0 : index
    %21 = vector.load %arg4[%c0_11, %c0_12] : memref<32x32xf32, #tpu.memory_space<vmem>>, vector<32x32xf32>
    %c0_13 = arith.constant 0 : index
    %c0_14 = arith.constant 0 : index
    %22 = vector.load %arg1[%c0_13, %c0_14] : memref<32x128xf32, #tpu.memory_space<vmem>>, vector<32x128xf32>
    %cst_15 = arith.constant dense<0.000000e+00> : vector<32x128xf32>
    %23 = tpu.matmul %21, %22, %cst_15 {dimension_numbers = #tpu.dot_dimension_numbers<[1], [0], [0], [1], [0, 0, 1, 1], [], []>} : vector<32x32xf32>, vector<32x128xf32>, vector<32x128xf32> -> vector<32x128xf32>
    %c0_16 = arith.constant 0 : index
    %c0_17 = arith.constant 0 : index
    %24 = vector.load %arg5[%c0_16, %c0_17] : memref<32x16xf32, #tpu.memory_space<vmem>>, vector<32x16xf32>
    %cst_18 = arith.constant dense<0.000000e+00> : vector<32x128xf32>
    %25 = tpu.matmul %24, %20, %cst_18 {dimension_numbers = #tpu.dot_dimension_numbers<[1], [0], [0], [1], [0, 0, 1, 1], [], []>} : vector<32x16xf32>, vector<16x128xf32>, vector<32x128xf32> -> vector<32x128xf32>
    %26 = arith.addf %23, %25 : vector<32x128xf32>
    %c0_19 = arith.constant 0 : index
    %c0_20 = arith.constant 0 : index
    %27 = vector.load %arg6[%c0_19, %c0_20] : memref<32x1xf32, #tpu.memory_space<vmem>>, vector<32x1xf32>
    %28 = vector.broadcast %27 : vector<32x1xf32> to vector<32x128xf32>
    %29 = arith.addf %26, %28 : vector<32x128xf32>
    %cst_21 = arith.constant 0.000000e+00 : f32
    %30 = vector.broadcast %cst_21 : f32 to vector<32x128xf32>
    %31 = arith.maximumf %29, %30 : vector<32x128xf32>
    %c0_22 = arith.constant 0 : index
    %c0_23 = arith.constant 0 : index
    %32 = vector.load %arg7[%c0_22, %c0_23] : memref<32x128xf32, #tpu.memory_space<vmem>>, vector<32x128xf32>
    tpu.vector_store %arg7[%c0_22, %c0_23], %31 {strides = array<i32>} : memref<32x128xf32, #tpu.memory_space<vmem>>, vector<32x128xf32>,
    %33 = vector.extract_strided_slice %3 {offsets = [16, 0], sizes = [16, 128], strides = [1, 1]} : vector<32x128xf32> to vector<16x128xf32>
    %34 = vector.extract_strided_slice %6 {offsets = [16, 0], sizes = [16, 128], strides = [1, 1]} : vector<32x128xf32> to vector<16x128xf32>
    %35 = vector.extract_strided_slice %9 {offsets = [16, 0], sizes = [16, 128], strides = [1, 1]} : vector<32x128xf32> to vector<16x128xf32>
    %36 = arith.mulf %33, %33 : vector<16x128xf32>
    %37 = arith.mulf %34, %34 : vector<16x128xf32>
    %38 = arith.addf %36, %37 : vector<16x128xf32>
    %39 = arith.mulf %35, %35 : vector<16x128xf32>
    %40 = arith.addf %38, %39 : vector<16x128xf32>
    %cst_24 = arith.constant 9.99999993E-9 : f32
    %41 = vector.broadcast %cst_24 : f32 to vector<16x128xf32>
    %42 = arith.maximumf %40, %41 : vector<16x128xf32>
    %43 = math.sqrt %42 : vector<16x128xf32>
    %44 = arith.negf %43 : vector<16x128xf32>
    %45 = math.exp %44 : vector<16x128xf32>
    %cst_25 = arith.constant 1.000000e+00 : f32
    %46 = vector.broadcast %cst_25 : f32 to vector<16x128xf32>
    %47 = arith.addf %46, %45 : vector<16x128xf32>
    %48 = arith.divf %46, %47 : vector<16x128xf32>
    %49 = arith.mulf %33, %48 : vector<16x128xf32>
    %c0_26 = arith.constant 0 : index
    %c0_27 = arith.constant 0 : index
    %c0_28 = arith.constant 0 : index
    %50 = vector.load %arg8[%c0_26, %c0_27, %c0_28] : memref<3x16x128xf32, #tpu.memory_space<vmem>>, vector<1x16x128xf32>
    %51 = vector.shape_cast %50 : vector<1x16x128xf32> to vector<16x128xf32>
    %52 = vector.shape_cast %49 : vector<16x128xf32> to vector<1x16x128xf32>
    tpu.vector_store %arg8[%c0_26, %c0_27, %c0_28], %52 {strides = array<i32>} : memref<3x16x128xf32, #tpu.memory_space<vmem>>, vector<1x16x128xf32>,
    %53 = arith.mulf %34, %48 : vector<16x128xf32>
    %c1_29 = arith.constant 1 : index
    %c0_30 = arith.constant 0 : index
    %c0_31 = arith.constant 0 : index
    %54 = vector.load %arg8[%c1_29, %c0_30, %c0_31] : memref<3x16x128xf32, #tpu.memory_space<vmem>>, vector<1x16x128xf32>
    %55 = vector.shape_cast %54 : vector<1x16x128xf32> to vector<16x128xf32>
    %56 = vector.shape_cast %53 : vector<16x128xf32> to vector<1x16x128xf32>
    tpu.vector_store %arg8[%c1_29, %c0_30, %c0_31], %56 {strides = array<i32>} : memref<3x16x128xf32, #tpu.memory_space<vmem>>, vector<1x16x128xf32>,
    %57 = arith.mulf %35, %48 : vector<16x128xf32>
    %c2_32 = arith.constant 2 : index
    %c0_33 = arith.constant 0 : index
    %c0_34 = arith.constant 0 : index
    %58 = vector.load %arg8[%c2_32, %c0_33, %c0_34] : memref<3x16x128xf32, #tpu.memory_space<vmem>>, vector<1x16x128xf32>
    %59 = vector.shape_cast %58 : vector<1x16x128xf32> to vector<16x128xf32>
    %60 = vector.shape_cast %57 : vector<16x128xf32> to vector<1x16x128xf32>
    tpu.vector_store %arg8[%c2_32, %c0_33, %c0_34], %60 {strides = array<i32>} : memref<3x16x128xf32, #tpu.memory_space<vmem>>, vector<1x16x128xf32>,
    return
  }
  func.func @transform_0(%arg0: i32) -> (i32, i32) {
    %c0_i32 = arith.constant 0 : i32
    %c0_i32_0 = arith.constant 0 : i32
    return %c0_i32, %arg0 : i32, i32
  }
  func.func @transform_1(%arg0: i32) -> (i32, i32, i32) {
    %c0_i32 = arith.constant 0 : i32
    %c0_i32_0 = arith.constant 0 : i32
    %c0_i32_1 = arith.constant 0 : i32
    return %c0_i32, %c0_i32_0, %arg0 : i32, i32, i32
  }
  func.func @transform_2(%arg0: i32) -> (i32, i32) {
    %c0_i32 = arith.constant 0 : i32
    %c0_i32_0 = arith.constant 0 : i32
    %c0_i32_1 = arith.constant 0 : i32
    return %c0_i32, %c0_i32_0 : i32, i32
  }
  func.func @transform_3(%arg0: i32) -> (i32, i32) {
    %c0_i32 = arith.constant 0 : i32
    %c0_i32_0 = arith.constant 0 : i32
    %c0_i32_1 = arith.constant 0 : i32
    return %c0_i32, %c0_i32_0 : i32, i32
  }
  func.func @transform_4(%arg0: i32) -> (i32, i32) {
    %c0_i32 = arith.constant 0 : i32
    %c0_i32_0 = arith.constant 0 : i32
    %c0_i32_1 = arith.constant 0 : i32
    return %c0_i32, %c0_i32_0 : i32, i32
  }
  func.func @transform_5(%arg0: i32) -> (i32, i32) {
    %c0_i32 = arith.constant 0 : i32
    %c0_i32_0 = arith.constant 0 : i32
    %c0_i32_1 = arith.constant 0 : i32
    return %c0_i32, %c0_i32_0 : i32, i32
  }
  func.func @transform_6(%arg0: i32) -> (i32, i32) {
    %c0_i32 = arith.constant 0 : i32
    %c0_i32_0 = arith.constant 0 : i32
    return %c0_i32, %arg0 : i32, i32
  }
  func.func @transform_7(%arg0: i32) -> (i32, i32, i32) {
    %c0_i32 = arith.constant 0 : i32
    %c0_i32_0 = arith.constant 0 : i32
    %c0_i32_1 = arith.constant 0 : i32
    return %c0_i32, %c0_i32_0, %arg0 : i32, i32, i32
  }
}

</mosaic_0001>

<llo_original>
// kernel: tpu_custom_call.1
$region0: #{tpu_custom_call.1}
  #allocation0 [shape = 'u32[]', space=smem, size = 0x4, offset = 0x4, fixed_abs, tag = 'smem constant byte address 0x4 - core index']
  #allocation1 [shape = 'u32[144,128]{1,0:T(1,128)}', space=vmem, size = 0x12000, scoped, tag = 'internal scratch']
  %s0 = inlined_call_operand.hbm [shape: f32[32,256], index: 0, kind: input, shape index: {}]
  %s1 = inlined_call_operand.vmem [shape: f32[3,16,256], index: 1, kind: input, shape index: {}]
  %s2 = inlined_call_operand.vmem [shape: f32[32,16], index: 2, kind: input, shape index: {}]
  %s3 = inlined_call_operand.vmem [shape: f32[32,32], index: 3, kind: input, shape index: {}]
  %s4 = inlined_call_operand.vmem [shape: f32[32,16], index: 4, kind: input, shape index: {}]
  %s5 = inlined_call_operand.vmem [shape: f32[32,1], index: 5, kind: input, shape index: {}]
  %s6 = inlined_call_operand.hbm [shape: f32[32,256], index: 6, kind: output, shape index: {0}]
  %s7 = inlined_call_operand.hbm [shape: f32[3,16,256], index: 7, kind: output, shape index: {1}]
  %8 = xla_tuple %s6, %s7
  %s9 = sld [smem:[#allocation0]]
  $region107: #{tpu_custom_call.1} parent=0
    _
  %s11 = ssub.s32 1, %s9
  %s12 = scalar_select 0, %s11, %s9
  $region1: #{tpu_custom_call.1} parent=0
    #allocation2 [shape = 'u8[32768]{0}', space=vmem, size = 0x8000, scoped, tag = 'input window, operand 0']
    #allocation3 [shape = 's32[2]{0}', space=sflag, size = 0x8, scoped, tag = 'scoped memory for tpu_custom_call.1']
    #allocation4 [shape = 's32[2]{0}', space=sflag, size = 0x8, scoped, tag = 'scoped memory for tpu_custom_call.1']
    #allocation5 [shape = 'u8[49152]{0}', space=vmem, size = 0xc000, scoped, tag = 'input window, operand 1']
    #allocation6 [shape = 'u8[32768]{0}', space=vmem, size = 0x8000, scoped, tag = 'output window, operand 0']
    #allocation7 [shape = 'u8[49152]{0}', space=vmem, size = 0xc000, scoped, tag = 'output window, operand 1']
    #allocation8 [shape = 's32[2]{0}', space=sflag, size = 0x8, scoped, tag = 'scoped memory for tpu_custom_call.1']
    %13 = vsyncpa [#allocation3], 0
    %s14 = scalar_lea.sflag [#allocation3], 1
    %15 = vsyncpa %s14, 0
    %16 = vsyncpa [#allocation4], 0
    %s17 = scalar_lea.sflag [#allocation4], 1
    %18 = vsyncpa %s17, 0
    %19 = vsyncpa [#allocation8], 0
    %s20 = scalar_lea.sflag [#allocation8], 1
    %21 = vsyncpa %s20, 0
    loop: start=0, step=1, limit=4
    $region2: #{tpu_custom_call.1} parent=1 // loop_pre_header
      _
    $region3: #{tpu_custom_call.1} parent=1 // loop_header
      %s23 = sphi 0, %s27
      %p24 = scmp.ge.s32.totalorder %s23, 4
      %s33 = sphi 0, %s35
      %s36 = sphi 0, %s33
      %s37 = sphi 0, %s36
      %s53 = sphi 0, %s37
      %s59 = sphi 0, %s61
      %s62 = sphi 0, %s59
      %s63 = sphi 0, %s62
      %s79 = sphi 0, %s63
      %s83 = sphi 0, %s83
      %s85 = sphi 0, %s83
      %s86 = sphi 0, %s85
      %s100 = sphi 0, %s86
      %s104 = sphi 0, %s104
      %s106 = sphi 0, %s104
      %s107 = sphi 0, %s106
      %s121 = sphi 0, %s107
      %s125 = sphi 0, %s125
      %s127 = sphi 0, %s125
      %s128 = sphi 0, %s127
      %s142 = sphi 0, %s128
      %s146 = sphi 0, %s146
      %s148 = sphi 0, %s146
      %s149 = sphi 0, %s148
      %s163 = sphi 0, %s149
      %s169 = sphi 0, %s171
      %s172 = sphi 0, %s169
      %s173 = sphi 0, %s172
      %s189 = sphi 0, %s173
      %s195 = sphi 0, %s197
      %s198 = sphi 0, %s195
      %s199 = sphi 0, %s198
      %s215 = sphi 0, %s199
    $region4: #{tpu_custom_call.1} parent=1 // loop_header_branch
      %26 = sbr.rel (%p24) target = $region8
    $region5: #{tpu_custom_call.1} parent=1 // loop_body
      %s28 = ssub.s32 %s23, 1
      %s29 = ssub.s32 %s23, 2
      %s30 = sadd.s32 %s23, 1
      %s31 = ssub.s32 %s23, %s30
      %p32 = scmp.eq.s32.totalorder %s31, 0
      %s34 = sadd.s32 %s33, 1
      %s35 = scalar_select %p32, %s33, %s34
      %p38 = pneg %p32
      %p39 = scmp.eq.s32.totalorder %s23, 1
      %p40 = por %p38, %p39
      %p41 = scmp.ne.s32.totalorder %s33, %s36
      %p42 = scmp.eq.s32.totalorder %s23, 0
      %p43 = por %p41, %p42
      %p44 = scmp.ne.s32.totalorder %s33, %s36
      %p45 = scmp.eq.s32.totalorder %s28, 1
      %p46 = por %p44, %p45
      %p47 = scmp.ne.s32.totalorder %s36, %s37
      %p48 = scmp.eq.s32.totalorder %s28, 0
      %p49 = por %p47, %p48
      %p50 = scmp.ne.s32.totalorder %s36, %s37
      %p51 = scmp.eq.s32.totalorder %s29, 1
      %p52 = por %p50, %p51
      %p54 = scmp.ne.s32.totalorder %s37, %s53
      %p55 = scmp.eq.s32.totalorder %s29, 0
      %p56 = por %p54, %p55
      %s57 = ssub.s32 %s23, %s30
      %p58 = scmp.eq.s32.totalorder %s57, 0
      %s60 = sadd.s32 %s59, 1
      %s61 = scalar_select %p58, %s59, %s60
      %p64 = pneg %p58
      %p65 = scmp.eq.s32.totalorder %s23, 1
      %p66 = por %p64, %p65
      %p67 = scmp.ne.s32.totalorder %s59, %s62
      %p68 = scmp.eq.s32.totalorder %s23, 0
      %p69 = por %p67, %p68
      %p70 = scmp.ne.s32.totalorder %s59, %s62
      %p71 = scmp.eq.s32.totalorder %s28, 1
      %p72 = por %p70, %p71
      %p73 = scmp.ne.s32.totalorder %s62, %s63
      %p74 = scmp.eq.s32.totalorder %s28, 0
      %p75 = por %p73, %p74
      %p76 = scmp.ne.s32.totalorder %s62, %s63
      %p77 = scmp.eq.s32.totalorder %s29, 1
      %p78 = por %p76, %p77
      %p80 = scmp.ne.s32.totalorder %s63, %s79
      %p81 = scmp.eq.s32.totalorder %s29, 0
      %p82 = por %p80, %p81
      %s84 = sadd.s32 %s83, 1
      %p87 = scmp.eq.s32.totalorder %s23, 1
      %p88 = scmp.ne.s32.totalorder %s83, %s85
      %p89 = scmp.eq.s32.totalorder %s23, 0
      %p90 = por %p88, %p89
      %p91 = scmp.ne.s32.totalorder %s83, %s85
      %p92 = scmp.eq.s32.totalorder %s28, 1
      %p93 = por %p91, %p92
      %p94 = scmp.ne.s32.totalorder %s85, %s86
      %p95 = scmp.eq.s32.totalorder %s28, 0
      %p96 = por %p94, %p95
      %p97 = scmp.ne.s32.totalorder %s85, %s86
      %p98 = scmp.eq.s32.totalorder %s29, 1
      %p99 = por %p97, %p98
      %p101 = scmp.ne.s32.totalorder %s86, %s100
      %p102 = scmp.eq.s32.totalorder %s29, 0
      %p103 = por %p101, %p102
      %s105 = sadd.s32 %s104, 1
      %p108 = scmp.eq.s32.totalorder %s23, 1
      %p109 = scmp.ne.s32.totalorder %s104, %s106
      %p110 = scmp.eq.s32.totalorder %s23, 0
      %p111 = por %p109, %p110
      %p112 = scmp.ne.s32.totalorder %s104, %s106
      %p113 = scmp.eq.s32.totalorder %s28, 1
      %p114 = por %p112, %p113
      %p115 = scmp.ne.s32.totalorder %s106, %s107
      %p116 = scmp.eq.s32.totalorder %s28, 0
      %p117 = por %p115, %p116
      %p118 = scmp.ne.s32.totalorder %s106, %s107
      %p119 = scmp.eq.s32.totalorder %s29, 1
      %p120 = por %p118, %p119
      %p122 = scmp.ne.s32.totalorder %s107, %s121
      %p123 = scmp.eq.s32.totalorder %s29, 0
      %p124 = por %p122, %p123
      %s126 = sadd.s32 %s125, 1
      %p129 = scmp.eq.s32.totalorder %s23, 1
      %p130 = scmp.ne.s32.totalorder %s125, %s127
      %p131 = scmp.eq.s32.totalorder %s23, 0
      %p132 = por %p130, %p131
      %p133 = scmp.ne.s32.totalorder %s125, %s127
      %p134 = scmp.eq.s32.totalorder %s28, 1
      %p135 = por %p133, %p134
      %p136 = scmp.ne.s32.totalorder %s127, %s128
      %p137 = scmp.eq.s32.totalorder %s28, 0
      %p138 = por %p136, %p137
      %p139 = scmp.ne.s32.totalorder %s127, %s128
      %p140 = scmp.eq.s32.totalorder %s29, 1
      %p141 = por %p139, %p140
      %p143 = scmp.ne.s32.totalorder %s128, %s142
      %p144 = scmp.eq.s32.totalorder %s29, 0
      %p145 = por %p143, %p144
      %s147 = sadd.s32 %s146, 1
      %p150 = scmp.eq.s32.totalorder %s23, 1
      %p151 = scmp.ne.s32.totalorder %s146, %s148
      %p152 = scmp.eq.s32.totalorder %s23, 0
      %p153 = por %p151, %p152
      %p154 = scmp.ne.s32.totalorder %s146, %s148
      %p155 = scmp.eq.s32.totalorder %s28, 1
      %p156 = por %p154, %p155
      %p157 = scmp.ne.s32.totalorder %s148, %s149
      %p158 = scmp.eq.s32.totalorder %s28, 0
      %p159 = por %p157, %p158
      %p160 = scmp.ne.s32.totalorder %s148, %s149
      %p161 = scmp.eq.s32.totalorder %s29, 1
      %p162 = por %p160, %p161
      %p164 = scmp.ne.s32.totalorder %s149, %s163
      %p165 = scmp.eq.s32.totalorder %s29, 0
      %p166 = por %p164, %p165
      %s167 = ssub.s32 %s23, %s30
      %p168 = scmp.eq.s32.totalorder %s167, 0
      %s170 = sadd.s32 %s169, 1
      %s171 = scalar_select %p168, %s169, %s170
      %p174 = pneg %p168
      %p175 = scmp.eq.s32.totalorder %s23, 1
      %p176 = por %p174, %p175
      %p177 = scmp.ne.s32.totalorder %s169, %s172
      %p178 = scmp.eq.s32.totalorder %s23, 0
      %p179 = por %p177, %p178
      %p180 = scmp.ne.s32.totalorder %s169, %s172
      %p181 = scmp.eq.s32.totalorder %s28, 1
      %p182 = por %p180, %p181
      %p183 = scmp.ne.s32.totalorder %s172, %s173
      %p184 = scmp.eq.s32.totalorder %s28, 0
      %p185 = por %p183, %p184
      %p186 = scmp.ne.s32.totalorder %s172, %s173
      %p187 = scmp.eq.s32.totalorder %s29, 1
      %p188 = por %p186, %p187
      %p190 = scmp.ne.s32.totalorder %s173, %s189
      %p191 = scmp.eq.s32.totalorder %s29, 0
      %p192 = por %p190, %p191
      %s193 = ssub.s32 %s23, %s30
      %p194 = scmp.eq.s32.totalorder %s193, 0
      %s196 = sadd.s32 %s195, 1
      %s197 = scalar_select %p194, %s195, %s196
      %p200 = pneg %p194
      %p201 = scmp.eq.s32.totalorder %s23, 1
      %p202 = por %p200, %p201
      %p203 = scmp.ne.s32.totalorder %s195, %s198
      %p204 = scmp.eq.s32.totalorder %s23, 0
      %p205 = por %p203, %p204
      %p206 = scmp.ne.s32.totalorder %s195, %s198
      %p207 = scmp.eq.s32.totalorder %s28, 1
      %p208 = por %p206, %p207
      %p209 = scmp.ne.s32.totalorder %s198, %s199
      %p210 = scmp.eq.s32.totalorder %s28, 0
      %p211 = por %p209, %p210
      %p212 = scmp.ne.s32.totalorder %s198, %s199
      %p213 = scmp.eq.s32.totalorder %s29, 1
      %p214 = por %p212, %p213
      %p216 = scmp.ne.s32.totalorder %s199, %s215
      %p217 = scmp.eq.s32.totalorder %s29, 0
      %p218 = por %p216, %p217
      %p219 = scmp.le.s32.totalorder 1, %s23
      %p220 = scmp.lt.s32.totalorder %s23, 3
      %p221 = pnand %p219, %p220
      %p222 = pneg %p221
      // Predicated region
      $region9: #{tpu_custom_call.1} parent=5 // pred_check
        _
      $region10: #{tpu_custom_call.1} parent=5 // pred_check_branch
        %224 = sbr.rel (%p221) target = $region12
      $region11: #{tpu_custom_call.1} parent=5 // pred_region
        %s225 = ssub.s32 %s23, 1
        // Predicated region
        $region13: #{tpu_custom_call.1} parent=11 // pred_check
          %p226 = pneg %p96
        $region14: #{tpu_custom_call.1} parent=11 // pred_check_branch
          %228 = sbr.rel (%p226) target = $region16
        $region15: #{tpu_custom_call.1} parent=11 // pred_region
          _
        $region16: #{tpu_custom_call.1} parent=11 // pred_fallthru
          _
        // Predicated region
        $region17: #{tpu_custom_call.1} parent=11 // pred_check
          %p229 = pneg %p117
        $region18: #{tpu_custom_call.1} parent=11 // pred_check_branch
          %231 = sbr.rel (%p229) target = $region20
        $region19: #{tpu_custom_call.1} parent=11 // pred_region
          _
        $region20: #{tpu_custom_call.1} parent=11 // pred_fallthru
          _
        // Predicated region
        $region21: #{tpu_custom_call.1} parent=11 // pred_check
          %p232 = pneg %p138
        $region22: #{tpu_custom_call.1} parent=11 // pred_check_branch
          %234 = sbr.rel (%p232) target = $region24
        $region23: #{tpu_custom_call.1} parent=11 // pred_region
          _
        $region24: #{tpu_custom_call.1} parent=11 // pred_fallthru
          _
        // Predicated region
        $region25: #{tpu_custom_call.1} parent=11 // pred_check
          %p235 = pneg %p159
        $region26: #{tpu_custom_call.1} parent=11 // pred_check_branch
          %237 = sbr.rel (%p235) target = $region28
        $region27: #{tpu_custom_call.1} parent=11 // pred_region
          _
        $region28: #{tpu_custom_call.1} parent=11 // pred_fallthru
          _
      $region12: #{tpu_custom_call.1} parent=5 // pred_fallthru
        _
      %p238 = scmp.lt.s32.totalorder %s23, 2
      // Predicated region
      $region29: #{tpu_custom_call.1} parent=5 // pred_check
        %p239 = pneg %p238
      $region30: #{tpu_custom_call.1} parent=5 // pred_check_branch
        %241 = sbr.rel (%p239) target = $region32
      $region31: #{tpu_custom_call.1} parent=5 // pred_region
        // Predicated region
        $region33: #{tpu_custom_call.1} parent=31 // pred_check
          %p242 = pneg %p43
        $region34: #{tpu_custom_call.1} parent=31 // pred_check_branch
          %244 = sbr.rel (%p242) target = $region36
        $region35: #{tpu_custom_call.1} parent=31 // pred_region
          %s245 = sand.u32 %s33, 1
          %s246 = scalar_lea.sflag [#allocation3], %s245
          %s247 = sand.u32 %s33, 1
          %s248 = smul.addr %s247, 32
          %s249 = scalar_lea.vmem [#allocation2], %s248
          %s251 = ssub.s32 512, 512
          %252 = vsyncadd %s246, %s251
          %s253 = smul.addr %s23, 128
          %s254 = scalar_lea.hbm %s0, %s253
          %s255 = sshll.u32 %s249, 4
          %s256 = int_to_ptr.vmem [resolvable:$true] %s255
          %261 = dma.hbm_to_vmem [thread:$0]  %s254, 512, %s256, %s246, 256, 128, 8
        $region36: #{tpu_custom_call.1} parent=31 // pred_fallthru
          _
        // Predicated region
        $region37: #{tpu_custom_call.1} parent=31 // pred_check
          %p262 = pneg %p69
        $region38: #{tpu_custom_call.1} parent=31 // pred_check_branch
          %264 = sbr.rel (%p262) target = $region40
        $region39: #{tpu_custom_call.1} parent=31 // pred_region
          %s265 = sand.u32 %s59, 1
          %s266 = sand.u32 %s59, 1
          %s267 = smul.addr %s266, 48
          %s268 = scalar_lea.vmem [#allocation5], %s267
          %s269 = smul.addr %s23, 8
          %s270 = scalar_lea.vmem %s1, %s269
          // Predicated region
          $region41: #{tpu_custom_call.1} parent=39 // pred_check
            _
          $region42: #{tpu_custom_call.1} parent=39 // pred_check_branch
            %272 = sbr.rel (0) target = $region44
          $region43: #{tpu_custom_call.1} parent=39 // pred_region
            // Predicated region
            $region45: #{tpu_custom_call.1} parent=43 // pred_check
              _
            $region46: #{tpu_custom_call.1} parent=43 // pred_check_branch
              %274 = sbr.rel (0) target = $region48
            $region47: #{tpu_custom_call.1} parent=43 // pred_region
              // Predicated region
              $region60: #{tpu_custom_call.1} parent=47 // pred_check
                _
              $region61: #{tpu_custom_call.1} parent=47 // pred_check_branch
                %299 = sbr.rel (0) target = $region63
              $region62: #{tpu_custom_call.1} parent=47 // pred_region
                loop: start=0, step=1, limit=1
                $region64: #{tpu_custom_call.1} parent=62 // loop_pre_header
                  _
                $region65: #{tpu_custom_call.1} parent=62 // loop_header
                  %s301 = sphi 0, %s305
                  %p302 = scmp.ge.s32.totalorder %s301, 1
                  %s306 = sphi %s270, %s270
                  %s307 = sphi %s268, %s268
                $region66: #{tpu_custom_call.1} parent=62 // loop_header_branch
                  %304 = sbr.rel (%p302) target = $region70
                $region67: #{tpu_custom_call.1} parent=62 // loop_body
                  %v308 = vld [vmem:[%s306] sm:$0xff]
                  %309 = vst [vmem:[%s307] sm:$0xff] %v308
                  %v310 = vld [vmem:[%s306 + $0x10] sm:$0xff]
                  %311 = vst [vmem:[%s307 + $0x8] sm:$0xff] %v310
                  %v312 = vld [vmem:[%s306 + $0x20] sm:$0xff]
                  %313 = vst [vmem:[%s307 + $0x10] sm:$0xff] %v312
                  %v314 = vld [vmem:[%s306 + $0x30] sm:$0xff]
                  %315 = vst [vmem:[%s307 + $0x18] sm:$0xff] %v314
                  %v316 = vld [vmem:[%s306 + $0x40] sm:$0xff]
                  %317 = vst [vmem:[%s307 + $0x20] sm:$0xff] %v316
                  %v318 = vld [vmem:[%s306 + $0x50] sm:$0xff]
                  %319 = vst [vmem:[%s307 + $0x28] sm:$0xff] %v318
                $region68: #{tpu_custom_call.1} parent=62 // loop_footer
                  %s305 = sadd.s32 1, %s301
                $region69: #{tpu_custom_call.1} parent=62 // loop_footer_branch
                  %300 = sbr.rel target = $region65
                $region70: #{tpu_custom_call.1} parent=62 // loop_exit
                  _
              $region63: #{tpu_custom_call.1} parent=47 // pred_fallthru
                _
              // Predicated region
              $region71: #{tpu_custom_call.1} parent=47 // pred_check
                _
              $region72: #{tpu_custom_call.1} parent=47 // pred_check_branch
                %321 = sbr.rel target = $region74
              $region73: #{tpu_custom_call.1} parent=47 // pred_region
                _
              $region74: #{tpu_custom_call.1} parent=47 // pred_fallthru
                _
            $region48: #{tpu_custom_call.1} parent=43 // pred_fallthru
              _
            // Predicated region
            $region49: #{tpu_custom_call.1} parent=43 // pred_check
              _
            $region50: #{tpu_custom_call.1} parent=43 // pred_check_branch
              %276 = sbr.rel target = $region52
            $region51: #{tpu_custom_call.1} parent=43 // pred_region
              loop: start=0, step=1, limit=1
              $region53: #{tpu_custom_call.1} parent=51 // loop_pre_header
                _
              $region54: #{tpu_custom_call.1} parent=51 // loop_header
                %s279 = sphi 0, %s283
                %p280 = scmp.ge.s32.totalorder %s279, 1
                %s284 = sphi %s270, %s270
                %s285 = sphi %s268, %s268
              $region55: #{tpu_custom_call.1} parent=51 // loop_header_branch
                %282 = sbr.rel (%p280) target = $region59
              $region56: #{tpu_custom_call.1} parent=51 // loop_body
                %v286 = vld [vmem:[%s284] sm:$0xff]
                %287 = vst [vmem:[%s285] sm:$0xff] %v286
                %v288 = vld [vmem:[%s284 + $0x10] sm:$0xff]
                %289 = vst [vmem:[%s285 + $0x8] sm:$0xff] %v288
                %v290 = vld [vmem:[%s284 + $0x20] sm:$0xff]
                %291 = vst [vmem:[%s285 + $0x10] sm:$0xff] %v290
                %v292 = vld [vmem:[%s284 + $0x30] sm:$0xff]
                %293 = vst [vmem:[%s285 + $0x18] sm:$0xff] %v292
                %v294 = vld [vmem:[%s284 + $0x40] sm:$0xff]
                %295 = vst [vmem:[%s285 + $0x20] sm:$0xff] %v294
                %v296 = vld [vmem:[%s284 + $0x50] sm:$0xff]
                %297 = vst [vmem:[%s285 + $0x28] sm:$0xff] %v296
              $region57: #{tpu_custom_call.1} parent=51 // loop_footer
                %s283 = sadd.s32 1, %s279
              $region58: #{tpu_custom_call.1} parent=51 // loop_footer_branch
                %278 = sbr.rel target = $region54
              $region59: #{tpu_custom_call.1} parent=51 // loop_exit
                _
            $region52: #{tpu_custom_call.1} parent=43 // pred_fallthru
              _
          $region44: #{tpu_custom_call.1} parent=39 // pred_fallthru
            _
          %322 = vnop
        $region40: #{tpu_custom_call.1} parent=31 // pred_fallthru
          _
      $region32: #{tpu_custom_call.1} parent=5 // pred_fallthru
        _
      %p323 = scmp.le.s32.totalorder 1, %s23
      %p324 = scmp.lt.s32.totalorder %s23, 3
      %p325 = pnand %p323, %p324
      %p326 = pneg %p325
      // Predicated region
      $region75: #{tpu_custom_call.1} parent=5 // pred_check
        _
      $region76: #{tpu_custom_call.1} parent=5 // pred_check_branch
        %328 = sbr.rel (%p325) target = $region78
      $region77: #{tpu_custom_call.1} parent=5 // pred_region
        %s329 = ssub.s32 %s23, 1
        %s330 = sand.u32 %s36, 1
        %s331 = scalar_lea.sflag [#allocation3], %s330
        %s332 = sand.u32 %s36, 1
        %s333 = smul.addr %s332, 32
        %s334 = scalar_lea.vmem [#allocation2], %s333
        // Predicated region
        $region79: #{tpu_custom_call.1} parent=77 // pred_check
          %p335 = pneg %p49
        $region80: #{tpu_custom_call.1} parent=77 // pred_check_branch
          %337 = sbr.rel (%p335) target = $region82
        $region81: #{tpu_custom_call.1} parent=77 // pred_region
          %338 = dma.done %s331, 512
        $region82: #{tpu_custom_call.1} parent=77 // pred_fallthru
          _
        %s339 = sand.u32 %s62, 1
        %s340 = sand.u32 %s62, 1
        %s341 = smul.addr %s340, 48
        %s342 = scalar_lea.vmem [#allocation5], %s341
        // Predicated region
        $region83: #{tpu_custom_call.1} parent=77 // pred_check
          %p343 = pneg %p75
        $region84: #{tpu_custom_call.1} parent=77 // pred_check_branch
          %345 = sbr.rel (%p343) target = $region86
        $region85: #{tpu_custom_call.1} parent=77 // pred_region
          _
        $region86: #{tpu_custom_call.1} parent=77 // pred_fallthru
          _
        %s346 = sand.u32 %s36, 1
        %s347 = scalar_lea.sflag [#allocation3], %s346
        %s348 = sand.u32 %s36, 1
        %s349 = smul.addr %s348, 32
        %s350 = scalar_lea.vmem [#allocation2], %s349
        %p351 = pneg %p49
        %p352 = pneg %p46
        %s353 = sand.u32 %s62, 1
        %s354 = sand.u32 %s62, 1
        %s355 = smul.addr %s354, 48
        %s356 = scalar_lea.vmem [#allocation5], %s355
        %p357 = pneg %p75
        %p358 = pneg %p72
        %p359 = pneg %p96
        %p360 = pneg %p93
        %p361 = pneg %p117
        %p362 = pneg %p114
        %p363 = pneg %p138
        %p364 = pneg %p135
        %p365 = pneg %p159
        %p366 = pneg %p156
        %p367 = pneg %p185
        %p368 = pneg %p182
        %s369 = sand.u32 %s172, 1
        %s370 = scalar_lea.sflag [#allocation4], %s369
        %s371 = sand.u32 %s172, 1
        %s372 = smul.addr %s371, 32
        %s373 = scalar_lea.vmem [#allocation6], %s372
        %p374 = pneg %p211
        %p375 = pneg %p208
        %s376 = sand.u32 %s198, 1
        %s377 = scalar_lea.sflag [#allocation8], %s376
        %s378 = sand.u32 %s198, 1
        %s379 = smul.addr %s378, 48
        %s380 = scalar_lea.vmem [#allocation7], %s379
        %v381 = vld [vmem:[%s2] sm:$0xff]
        %v382 = vld [vmem:[%s2 + $0x8] sm:$0xff]
        %v383 = vld [vmem:[%s2 + $0x10] sm:$0xff]
        %v384 = vld [vmem:[%s2 + $0x18] sm:$0xff]
        %v385 = vld [vmem:[%s342] sm:$0xff]
        %v386 = vld [vmem:[%s342 + $0x8] sm:$0xff]
        %vm387 = vcmask 130048
        %v389 = vsel %vm387, %v381, 0
        %v392 = vsel %vm387, %v382, 0
        %v395 = vsel %vm387, %v383, 0
        %v398 = vsel %vm387, %v384, 0
        %400 = vmatprep.subr.mxu0 0.0
        %401 = vmatpush1.msra.mxu0 %v385
        %402 = vmatprep.subr.mxu0 0.0
        %403 = vmatpush1.msra.mxu0 %v386
        %404 = vmatprep.subr.mxu0 0.0
        %405 = vmatpush1.msra.mxu0 0.0
        %406 = vmatprep.subr.mxu0 0.0
        %407 = vmatpush1.msra.mxu0 0.0
        %408 = vmatprep.subr.mxu0 0.0
        %409 = vmatpush1.msra.mxu0 0.0
        %410 = vmatprep.subr.mxu0 0.0
        %411 = vmatpush1.msra.mxu0 0.0
        %412 = vmatprep.subr.mxu0 0.0
        %413 = vmatpush1.msra.mxu0 0.0
        %414 = vmatprep.subr.mxu0 0.0
        %415 = vmatpush1.msra.mxu0 0.0
        %416 = vmatprep.subr.mxu0 0.0
        %417 = vmatpush1.msra.mxu0 0.0
        %418 = vmatprep.subr.mxu0 0.0
        %419 = vmatpush1.msra.mxu0 0.0
        %420 = vmatprep.subr.mxu0 0.0
        %421 = vmatpush1.msra.mxu0 0.0
        %422 = vmatprep.subr.mxu0 0.0
        %423 = vmatpush1.msra.mxu0 0.0
        %424 = vmatprep.subr.mxu0 0.0
        %425 = vmatpush1.msra.mxu0 0.0
        %426 = vmatprep.subr.mxu0 0.0
        %427 = vmatpush1.msra.mxu0 0.0
        %428 = vmatprep.subr.mxu0 0.0
        %429 = vmatpush1.msra.mxu0 0.0
        %430 = vmatprep.subr.mxu0 0.0
        %431 = vmatpush1.msra.mxu0 0.0
        %432 = vmatprep.subr.mxu0 0.0
        %433 = vmatpush1.msra.mxu0 0.0
        %434 = vmatprep.subr.mxu0 0.0
        %435 = vmatpush1.msra.mxu0 0.0
        %436 = vmatprep.subr.mxu0 0.0
        %437 = vmatpush1.msra.mxu0 0.0
        %438 = vmatprep.subr.mxu0 0.0
        %439 = vmatpush1.msra.mxu0 0.0
        %440 = vmatprep.subr.mxu0 0.0
        %441 = vmatpush1.msra.mxu0 0.0
        %442 = vmatprep.subr.mxu0 0.0
        %443 = vmatpush1.msra.mxu0 0.0
        %444 = vmatprep.subr.mxu0 0.0
        %445 = vmatpush1.msra.mxu0 0.0
        %446 = vmatprep.subr.mxu0 0.0
        %447 = vmatpush1.msra.mxu0 0.0
        %448 = vmatprep.subr.mxu0 0.0
        %449 = vmatpush1.msra.mxu0 0.0
        %450 = vmatprep.subr.mxu0 0.0
        %451 = vmatpush1.msra.mxu0 0.0
        %452 = vmatprep.subr.mxu0 0.0
        %453 = vmatpush1.msra.mxu0 0.0
        %454 = vmatprep.subr.mxu0 0.0
        %455 = vmatpush1.msra.mxu0 0.0
        %456 = vmatprep.subr.mxu0 0.0
        %457 = vmatpush1.msra.mxu0 0.0
        %458 = vmatprep.subr.mxu0 0.0
        %459 = vmatpush1.msra.mxu0 0.0
        %460 = vmatprep.subr.mxu0 0.0
        %461 = vmatpush1.msra.mxu0 0.0
        %462 = vmatprep.subr.mxu0 0.0
        %463 = vmatpush1.msra.mxu0 0.0
        %464 = vmatprep.mubr.f32.mxu0 0.0
        %465 = vmatmul.mubr.f32.gmra.mrb[0].mxu0 %v389
        %v466 = vpop.f32.mrb[0].mxu0
        %v467 = vadd.f32 0.0, %v466
        %v468 = vpop.f32.mrb[0].mxu0
        %469 = vmatprep.mubr.f32.mxu0 0.0
        %470 = vmatmul.mubr.f32.gmra.mrb[0].mxu0 %v392
        %v471 = vpop.f32.mrb[0].mxu0
        %v472 = vadd.f32 0.0, %v471
        %v473 = vpop.f32.mrb[0].mxu0
        %474 = vmatprep.mubr.f32.mxu0 0.0
        %475 = vmatmul.mubr.f32.gmra.mrb[0].mxu0 %v395
        %v476 = vpop.f32.mrb[0].mxu0
        %v477 = vadd.f32 0.0, %v476
        %v478 = vpop.f32.mrb[0].mxu0
        %479 = vmatprep.mubr.f32.mxu0 0.0
        %480 = vmatmul.mubr.f32.gmra.mrb[0].mxu0 %v398
        %v481 = vpop.f32.mrb[0].mxu0
        %v482 = vadd.f32 0.0, %v481
        %v483 = vpop.f32.mrb[0].mxu0
        %484 = vdwg.mxu0
        %s485 = scalar_lea.vmem %s342, 16 [#allocation5]
        %v486 = vld [vmem:[%s485] sm:$0xff]
        %v487 = vld [vmem:[%s485 + $0x8] sm:$0xff]
        %488 = vmatprep.subr.mxu0 0.0
        %489 = vmatpush1.msra.mxu0 %v486
        %490 = vmatprep.subr.mxu0 0.0
        %491 = vmatpush1.msra.mxu0 %v487
        %492 = vmatprep.subr.mxu0 0.0
        %493 = vmatpush1.msra.mxu0 0.0
        %494 = vmatprep.subr.mxu0 0.0
        %495 = vmatpush1.msra.mxu0 0.0
        %496 = vmatprep.subr.mxu0 0.0
        %497 = vmatpush1.msra.mxu0 0.0
        %498 = vmatprep.subr.mxu0 0.0
        %499 = vmatpush1.msra.mxu0 0.0
        %500 = vmatprep.subr.mxu0 0.0
        %501 = vmatpush1.msra.mxu0 0.0
        %502 = vmatprep.subr.mxu0 0.0
        %503 = vmatpush1.msra.mxu0 0.0
        %504 = vmatprep.subr.mxu0 0.0
        %505 = vmatpush1.msra.mxu0 0.0
        %506 = vmatprep.subr.mxu0 0.0
        %507 = vmatpush1.msra.mxu0 0.0
        %508 = vmatprep.subr.mxu0 0.0
        %509 = vmatpush1.msra.mxu0 0.0
        %510 = vmatprep.subr.mxu0 0.0
        %511 = vmatpush1.msra.mxu0 0.0
        %512 = vmatprep.subr.mxu0 0.0
        %513 = vmatpush1.msra.mxu0 0.0
        %514 = vmatprep.subr.mxu0 0.0
        %515 = vmatpush1.msra.mxu0 0.0
        %516 = vmatprep.subr.mxu0 0.0
        %517 = vmatpush1.msra.mxu0 0.0
        %518 = vmatprep.subr.mxu0 0.0
        %519 = vmatpush1.msra.mxu0 0.0
        %520 = vmatprep.subr.mxu0 0.0
        %521 = vmatpush1.msra.mxu0 0.0
        %522 = vmatprep.subr.mxu0 0.0
        %523 = vmatpush1.msra.mxu0 0.0
        %524 = vmatprep.subr.mxu0 0.0
        %525 = vmatpush1.msra.mxu0 0.0
        %526 = vmatprep.subr.mxu0 0.0
        %527 = vmatpush1.msra.mxu0 0.0
        %528 = vmatprep.subr.mxu0 0.0
        %529 = vmatpush1.msra.mxu0 0.0
        %530 = vmatprep.subr.mxu0 0.0
        %531 = vmatpush1.msra.mxu0 0.0
        %532 = vmatprep.subr.mxu0 0.0
        %533 = vmatpush1.msra.mxu0 0.0
        %534 = vmatprep.subr.mxu0 0.0
        %535 = vmatpush1.msra.mxu0 0.0
        %536 = vmatprep.subr.mxu0 0.0
        %537 = vmatpush1.msra.mxu0 0.0
        %538 = vmatprep.subr.mxu0 0.0
        %539 = vmatpush1.msra.mxu0 0.0
        %540 = vmatprep.subr.mxu0 0.0
        %541 = vmatpush1.msra.mxu0 0.0
        %542 = vmatprep.subr.mxu0 0.0
        %543 = vmatpush1.msra.mxu0 0.0
        %544 = vmatprep.subr.mxu0 0.0
        %545 = vmatpush1.msra.mxu0 0.0
        %546 = vmatprep.subr.mxu0 0.0
        %547 = vmatpush1.msra.mxu0 0.0
        %548 = vmatprep.subr.mxu0 0.0
        %549 = vmatpush1.msra.mxu0 0.0
        %550 = vmatprep.subr.mxu0 0.0
        %551 = vmatpush1.msra.mxu0 0.0
        %552 = vmatprep.mubr.f32.mxu0 0.0
        %553 = vmatmul.mubr.f32.gmra.mrb[0].mxu0 %v389
        %v554 = vpop.f32.mrb[0].mxu0
        %v555 = vadd.f32 0.0, %v554
        %v556 = vpop.f32.mrb[0].mxu0
        %557 = vmatprep.mubr.f32.mxu0 0.0
        %558 = vmatmul.mubr.f32.gmra.mrb[0].mxu0 %v392
        %v559 = vpop.f32.mrb[0].mxu0
        %v560 = vadd.f32 0.0, %v559
        %v561 = vpop.f32.mrb[0].mxu0
        %562 = vmatprep.mubr.f32.mxu0 0.0
        %563 = vmatmul.mubr.f32.gmra.mrb[0].mxu0 %v395
        %v564 = vpop.f32.mrb[0].mxu0
        %v565 = vadd.f32 0.0, %v564
        %v566 = vpop.f32.mrb[0].mxu0
        %567 = vmatprep.mubr.f32.mxu0 0.0
        %568 = vmatmul.mubr.f32.gmra.mrb[0].mxu0 %v398
        %v569 = vpop.f32.mrb[0].mxu0
        %v570 = vadd.f32 0.0, %v569
        %v571 = vpop.f32.mrb[0].mxu0
        %572 = vdwg.mxu0
        %s573 = scalar_lea.vmem %s342, 32 [#allocation5]
        %v574 = vld [vmem:[%s573] sm:$0xff]
        %v575 = vld [vmem:[%s573 + $0x8] sm:$0xff]
        %576 = vmatprep.subr.mxu0 0.0
        %577 = vmatpush1.msra.mxu0 %v574
        %578 = vmatprep.subr.mxu0 0.0
        %579 = vmatpush1.msra.mxu0 %v575
        %580 = vmatprep.subr.mxu0 0.0
        %581 = vmatpush1.msra.mxu0 0.0
        %582 = vmatprep.subr.mxu0 0.0
        %583 = vmatpush1.msra.mxu0 0.0
        %584 = vmatprep.subr.mxu0 0.0
        %585 = vmatpush1.msra.mxu0 0.0
        %586 = vmatprep.subr.mxu0 0.0
        %587 = vmatpush1.msra.mxu0 0.0
        %588 = vmatprep.subr.mxu0 0.0
        %589 = vmatpush1.msra.mxu0 0.0
        %590 = vmatprep.subr.mxu0 0.0
        %591 = vmatpush1.msra.mxu0 0.0
        %592 = vmatprep.subr.mxu0 0.0
        %593 = vmatpush1.msra.mxu0 0.0
        %594 = vmatprep.subr.mxu0 0.0
        %595 = vmatpush1.msra.mxu0 0.0
        %596 = vmatprep.subr.mxu0 0.0
        %597 = vmatpush1.msra.mxu0 0.0
        %598 = vmatprep.subr.mxu0 0.0
        %599 = vmatpush1.msra.mxu0 0.0
        %600 = vmatprep.subr.mxu0 0.0
        %601 = vmatpush1.msra.mxu0 0.0
        %602 = vmatprep.subr.mxu0 0.0
        %603 = vmatpush1.msra.mxu0 0.0
        %604 = vmatprep.subr.mxu0 0.0
        %605 = vmatpush1.msra.mxu0 0.0
        %606 = vmatprep.subr.mxu0 0.0
        %607 = vmatpush1.msra.mxu0 0.0
        %608 = vmatprep.subr.mxu0 0.0
        %609 = vmatpush1.msra.mxu0 0.0
        %610 = vmatprep.subr.mxu0 0.0
        %611 = vmatpush1.msra.mxu0 0.0
        %612 = vmatprep.subr.mxu0 0.0
        %613 = vmatpush1.msra.mxu0 0.0
        %614 = vmatprep.subr.mxu0 0.0
        %615 = vmatpush1.msra.mxu0 0.0
        %616 = vmatprep.subr.mxu0 0.0
        %617 = vmatpush1.msra.mxu0 0.0
        %618 = vmatprep.subr.mxu0 0.0
        %619 = vmatpush1.msra.mxu0 0.0
        %620 = vmatprep.subr.mxu0 0.0
        %621 = vmatpush1.msra.mxu0 0.0
        %622 = vmatprep.subr.mxu0 0.0
        %623 = vmatpush1.msra.mxu0 0.0
        %624 = vmatprep.subr.mxu0 0.0
        %625 = vmatpush1.msra.mxu0 0.0
        %626 = vmatprep.subr.mxu0 0.0
        %627 = vmatpush1.msra.mxu0 0.0
        %628 = vmatprep.subr.mxu0 0.0
        %629 = vmatpush1.msra.mxu0 0.0
        %630 = vmatprep.subr.mxu0 0.0
        %631 = vmatpush1.msra.mxu0 0.0
        %632 = vmatprep.subr.mxu0 0.0
        %633 = vmatpush1.msra.mxu0 0.0
        %634 = vmatprep.subr.mxu0 0.0
        %635 = vmatpush1.msra.mxu0 0.0
        %636 = vmatprep.subr.mxu0 0.0
        %637 = vmatpush1.msra.mxu0 0.0
        %638 = vmatprep.subr.mxu0 0.0
        %639 = vmatpush1.msra.mxu0 0.0
        %640 = vmatprep.mubr.f32.mxu0 0.0
        %641 = vmatmul.mubr.f32.gmra.mrb[0].mxu0 %v389
        %v642 = vpop.f32.mrb[0].mxu0
        %v643 = vadd.f32 0.0, %v642
        %v644 = vpop.f32.mrb[0].mxu0
        %645 = vmatprep.mubr.f32.mxu0 0.0
        %646 = vmatmul.mubr.f32.gmra.mrb[0].mxu0 %v392
        %v647 = vpop.f32.mrb[0].mxu0
        %v648 = vadd.f32 0.0, %v647
        %v649 = vpop.f32.mrb[0].mxu0
        %650 = vmatprep.mubr.f32.mxu0 0.0
        %651 = vmatmul.mubr.f32.gmra.mrb[0].mxu0 %v395
        %v652 = vpop.f32.mrb[0].mxu0
        %v653 = vadd.f32 0.0, %v652
        %v654 = vpop.f32.mrb[0].mxu0
        %655 = vmatprep.mubr.f32.mxu0 0.0
        %656 = vmatmul.mubr.f32.gmra.mrb[0].mxu0 %v398
        %v657 = vpop.f32.mrb[0].mxu0
        %v658 = vadd.f32 0.0, %v657
        %v659 = vpop.f32.mrb[0].mxu0
        %660 = vdwg.mxu0
        %v661 = vmul.f32 %v467, %v467
        %v662 = vmul.f32 %v472, %v472
        %v663 = vmul.f32 %v555, %v555
        %v664 = vmul.f32 %v560, %v560
        %v665 = vadd.f32 %v661, %v663
        %v666 = vadd.f32 %v662, %v664
        %v667 = vmul.f32 %v643, %v643
        %v668 = vmul.f32 %v648, %v648
        %v669 = vadd.f32 %v665, %v667
        %v670 = vadd.f32 %v666, %v668
        %v671 = vmax.f32 %v669, 1e-08
        %v672 = vmax.f32 %v670, 1e-08
        %v673 = vrsqrt.pop %v671
        %v674 = vmul.f32 %v671, %v673
        %vm675 = vcmp.eq.f32.partialorder %v671, inf
        %v676 = vsel %vm675, %v671, %v674
        %vm677 = vcmp.eq.f32.partialorder %v671, 0.0
        %v678 = vand.u32 %v671, 2147483648
        %v679 = vsel %vm677, %v678, %v676
        %v680 = vrsqrt.pop %v672
        %v681 = vmul.f32 %v672, %v680
        %vm682 = vcmp.eq.f32.partialorder %v672, inf
        %v683 = vsel %vm682, %v672, %v681
        %vm684 = vcmp.eq.f32.partialorder %v672, 0.0
        %v685 = vand.u32 %v672, 2147483648
        %v686 = vsel %vm684, %v685, %v683
        %v687 = vld [vmem:[%s3] sm:$0xff]
        %v688 = vld [vmem:[%s3 + $0x8] sm:$0xff]
        %v689 = vld [vmem:[%s3 + $0x10] sm:$0xff]
        %v690 = vld [vmem:[%s3 + $0x18] sm:$0xff]
        %v691 = vld [vmem:[%s334] sm:$0xff]
        %v692 = vld [vmem:[%s334 + $0x8] sm:$0xff]
        %v693 = vld [vmem:[%s334 + $0x10] sm:$0xff]
        %v694 = vld [vmem:[%s334 + $0x18] sm:$0xff]
        %v695 = vld [vmem:[%s4] sm:$0xff]
        %v696 = vld [vmem:[%s4 + $0x8] sm:$0xff]
        %v697 = vld [vmem:[%s4 + $0x10] sm:$0xff]
        %v698 = vld [vmem:[%s4 + $0x18] sm:$0xff]
        %v700 = vsel %vm387, %v695, 0
        %v703 = vsel %vm387, %v696, 0
        %v706 = vsel %vm387, %v697, 0
        %v709 = vsel %vm387, %v698, 0
        %711 = vmatprep.subr.mxu0 0.0
        %712 = vmatpush1.msra.mxu0 %v679
        %713 = vmatprep.subr.mxu0 0.0
        %714 = vmatpush1.msra.mxu0 %v686
        %715 = vmatprep.subr.mxu0 0.0
        %716 = vmatpush1.msra.mxu0 0.0
        %717 = vmatprep.subr.mxu0 0.0
        %718 = vmatpush1.msra.mxu0 0.0
        %719 = vmatprep.subr.mxu0 0.0
        %720 = vmatpush1.msra.mxu0 0.0
        %721 = vmatprep.subr.mxu0 0.0
        %722 = vmatpush1.msra.mxu0 0.0
        %723 = vmatprep.subr.mxu0 0.0
        %724 = vmatpush1.msra.mxu0 0.0
        %725 = vmatprep.subr.mxu0 0.0
        %726 = vmatpush1.msra.mxu0 0.0
        %727 = vmatprep.subr.mxu0 0.0
        %728 = vmatpush1.msra.mxu0 0.0
        %729 = vmatprep.subr.mxu0 0.0
        %730 = vmatpush1.msra.mxu0 0.0
        %731 = vmatprep.subr.mxu0 0.0
        %732 = vmatpush1.msra.mxu0 0.0
        %733 = vmatprep.subr.mxu0 0.0
        %734 = vmatpush1.msra.mxu0 0.0
        %735 = vmatprep.subr.mxu0 0.0
        %736 = vmatpush1.msra.mxu0 0.0
        %737 = vmatprep.subr.mxu0 0.0
        %738 = vmatpush1.msra.mxu0 0.0
        %739 = vmatprep.subr.mxu0 0.0
        %740 = vmatpush1.msra.mxu0 0.0
        %741 = vmatprep.subr.mxu0 0.0
        %742 = vmatpush1.msra.mxu0 0.0
        %743 = vmatprep.subr.mxu0 0.0
        %744 = vmatpush1.msra.mxu0 0.0
        %745 = vmatprep.subr.mxu0 0.0
        %746 = vmatpush1.msra.mxu0 0.0
        %747 = vmatprep.subr.mxu0 0.0
        %748 = vmatpush1.msra.mxu0 0.0
        %749 = vmatprep.subr.mxu0 0.0
        %750 = vmatpush1.msra.mxu0 0.0
        %751 = vmatprep.subr.mxu0 0.0
        %752 = vmatpush1.msra.mxu0 0.0
        %753 = vmatprep.subr.mxu0 0.0
        %754 = vmatpush1.msra.mxu0 0.0
        %755 = vmatprep.subr.mxu0 0.0
        %756 = vmatpush1.msra.mxu0 0.0
        %757 = vmatprep.subr.mxu0 0.0
        %758 = vmatpush1.msra.mxu0 0.0
        %759 = vmatprep.subr.mxu0 0.0
        %760 = vmatpush1.msra.mxu0 0.0
        %761 = vmatprep.subr.mxu0 0.0
        %762 = vmatpush1.msra.mxu0 0.0
        %763 = vmatprep.subr.mxu0 0.0
        %764 = vmatpush1.msra.mxu0 0.0
        %765 = vmatprep.subr.mxu0 0.0
        %766 = vmatpush1.msra.mxu0 0.0
        %767 = vmatprep.subr.mxu0 0.0
        %768 = vmatpush1.msra.mxu0 0.0
        %769 = vmatprep.subr.mxu0 0.0
        %770 = vmatpush1.msra.mxu0 0.0
        %771 = vmatprep.subr.mxu0 0.0
        %772 = vmatpush1.msra.mxu0 0.0
        %773 = vmatprep.subr.mxu0 0.0
        %774 = vmatpush1.msra.mxu0 0.0
        %775 = vmatprep.mubr.f32.mxu0 0.0
        %776 = vmatmul.mubr.f32.gmra.mrb[0].mxu0 %v700
        %v777 = vpop.f32.mrb[0].mxu0
        %v778 = vadd.f32 0.0, %v777
        %v779 = vpop.f32.mrb[0].mxu0
        %780 = vmatprep.mubr.f32.mxu0 0.0
        %781 = vmatmul.mubr.f32.gmra.mrb[0].mxu0 %v703
        %v782 = vpop.f32.mrb[0].mxu0
        %v783 = vadd.f32 0.0, %v782
        %v784 = vpop.f32.mrb[0].mxu0
        %785 = vmatprep.mubr.f32.mxu0 0.0
        %786 = vmatmul.mubr.f32.gmra.mrb[0].mxu0 %v706
        %v787 = vpop.f32.mrb[0].mxu0
        %v788 = vadd.f32 0.0, %v787
        %v789 = vpop.f32.mrb[0].mxu0
        %790 = vmatprep.mubr.f32.mxu0 0.0
        %791 = vmatmul.mubr.f32.gmra.mrb[0].mxu0 %v709
        %v792 = vpop.f32.mrb[0].mxu0
        %v793 = vadd.f32 0.0, %v792
        %v794 = vpop.f32.mrb[0].mxu0
        %795 = vdwg.mxu0
        %vm796 = vcmask 261120
        %v798 = vsel %vm796, %v687, 0
        %v801 = vsel %vm796, %v688, 0
        %v804 = vsel %vm796, %v689, 0
        %v807 = vsel %vm796, %v690, 0
        %809 = vmatprep.subr.mxu0 0.0
        %810 = vmatpush1.msra.mxu0 %v691
        %811 = vmatprep.subr.mxu0 0.0
        %812 = vmatpush1.msra.mxu0 %v692
        %813 = vmatprep.subr.mxu0 0.0
        %814 = vmatpush1.msra.mxu0 %v693
        %815 = vmatprep.subr.mxu0 0.0
        %816 = vmatpush1.msra.mxu0 %v694
        %817 = vmatprep.subr.mxu0 0.0
        %818 = vmatpush1.msra.mxu0 0.0
        %819 = vmatprep.subr.mxu0 0.0
        %820 = vmatpush1.msra.mxu0 0.0
        %821 = vmatprep.subr.mxu0 0.0
        %822 = vmatpush1.msra.mxu0 0.0
        %823 = vmatprep.subr.mxu0 0.0
        %824 = vmatpush1.msra.mxu0 0.0
        %825 = vmatprep.subr.mxu0 0.0
        %826 = vmatpush1.msra.mxu0 0.0
        %827 = vmatprep.subr.mxu0 0.0
        %828 = vmatpush1.msra.mxu0 0.0
        %829 = vmatprep.subr.mxu0 0.0
        %830 = vmatpush1.msra.mxu0 0.0
        %831 = vmatprep.subr.mxu0 0.0
        %832 = vmatpush1.msra.mxu0 0.0
        %833 = vmatprep.subr.mxu0 0.0
        %834 = vmatpush1.msra.mxu0 0.0
        %835 = vmatprep.subr.mxu0 0.0
        %836 = vmatpush1.msra.mxu0 0.0
        %837 = vmatprep.subr.mxu0 0.0
        %838 = vmatpush1.msra.mxu0 0.0
        %839 = vmatprep.subr.mxu0 0.0
        %840 = vmatpush1.msra.mxu0 0.0
        %841 = vmatprep.subr.mxu0 0.0
        %842 = vmatpush1.msra.mxu0 0.0
        %843 = vmatprep.subr.mxu0 0.0
        %844 = vmatpush1.msra.mxu0 0.0
        %845 = vmatprep.subr.mxu0 0.0
        %846 = vmatpush1.msra.mxu0 0.0
        %847 = vmatprep.subr.mxu0 0.0
        %848 = vmatpush1.msra.mxu0 0.0
        %849 = vmatprep.subr.mxu0 0.0
        %850 = vmatpush1.msra.mxu0 0.0
        %851 = vmatprep.subr.mxu0 0.0
        %852 = vmatpush1.msra.mxu0 0.0
        %853 = vmatprep.subr.mxu0 0.0
        %854 = vmatpush1.msra.mxu0 0.0
        %855 = vmatprep.subr.mxu0 0.0
        %856 = vmatpush1.msra.mxu0 0.0
        %857 = vmatprep.subr.mxu0 0.0
        %858 = vmatpush1.msra.mxu0 0.0
        %859 = vmatprep.subr.mxu0 0.0
        %860 = vmatpush1.msra.mxu0 0.0
        %861 = vmatprep.subr.mxu0 0.0
        %862 = vmatpush1.msra.mxu0 0.0
        %863 = vmatprep.subr.mxu0 0.0
        %864 = vmatpush1.msra.mxu0 0.0
        %865 = vmatprep.subr.mxu0 0.0
        %866 = vmatpush1.msra.mxu0 0.0
        %867 = vmatprep.subr.mxu0 0.0
        %868 = vmatpush1.msra.mxu0 0.0
        %869 = vmatprep.subr.mxu0 0.0
        %870 = vmatpush1.msra.mxu0 0.0
        %871 = vmatprep.subr.mxu0 0.0
        %872 = vmatpush1.msra.mxu0 0.0
        %873 = vmatprep.mubr.f32.mxu0 0.0
        %874 = vmatmul.mubr.f32.gmra.mrb[0].mxu0 %v798
        %v875 = vpop.f32.mrb[0].mxu0
        %v876 = vadd.f32 %v778, %v875
        %v877 = vpop.f32.mrb[0].mxu0
        %878 = vmatprep.mubr.f32.mxu0 0.0
        %879 = vmatmul.mubr.f32.gmra.mrb[0].mxu0 %v801
        %v880 = vpop.f32.mrb[0].mxu0
        %v881 = vadd.f32 %v783, %v880
        %v882 = vpop.f32.mrb[0].mxu0
        %883 = vmatprep.mubr.f32.mxu0 0.0
        %884 = vmatmul.mubr.f32.gmra.mrb[0].mxu0 %v804
        %v885 = vpop.f32.mrb[0].mxu0
        %v886 = vadd.f32 %v788, %v885
        %v887 = vpop.f32.mrb[0].mxu0
        %888 = vmatprep.mubr.f32.mxu0 0.0
        %889 = vmatmul.mubr.f32.gmra.mrb[0].mxu0 %v807
        %v890 = vpop.f32.mrb[0].mxu0
        %v891 = vadd.f32 %v793, %v890
        %v892 = vpop.f32.mrb[0].mxu0
        %893 = vdwg.mxu0
        %v894 = vld [vmem:[%s5] sm:$0xff]
        %v895 = vld [vmem:[%s5 + $0x8] sm:$0xff]
        %v896 = vld [vmem:[%s5 + $0x10] sm:$0xff]
        %v897 = vld [vmem:[%s5 + $0x18] sm:$0xff]
        %899 = vset.pattern.permute.xlu0 0
        %900 = vperm.xlu0 %899, %v894
        %v901 = vpop.permute.xlu0 %900
        %904 = vset.pattern.permute.xlu0 0
        %905 = vperm.xlu0 %904, %v895
        %v906 = vpop.permute.xlu0 %905
        %909 = vset.pattern.permute.xlu0 0
        %910 = vperm.xlu0 %909, %v896
        %v911 = vpop.permute.xlu0 %910
        %914 = vset.pattern.permute.xlu0 0
        %915 = vperm.xlu0 %914, %v897
        %v916 = vpop.permute.xlu0 %915
        %v918 = vadd.f32 %v876, %v901
        %v919 = vadd.f32 %v881, %v906
        %v920 = vadd.f32 %v886, %v911
        %v921 = vadd.f32 %v891, %v916
        %v922 = vmax.f32 %v918, 0.0
        %v923 = vmax.f32 %v919, 0.0
        %v924 = vmax.f32 %v920, 0.0
        %v925 = vmax.f32 %v921, 0.0
        %926 = vst [vmem:[%s373] sm:$0xff] %v922
        %927 = vst [vmem:[%s373 + $0x8] sm:$0xff] %v923
        %928 = vst [vmem:[%s373 + $0x10] sm:$0xff] %v924
        %929 = vst [vmem:[%s373 + $0x18] sm:$0xff] %v925
        %v930 = vmul.f32 %v477, %v477
        %v931 = vmul.f32 %v482, %v482
        %v932 = vmul.f32 %v565, %v565
        %v933 = vmul.f32 %v570, %v570
        %v934 = vadd.f32 %v930, %v932
        %v935 = vadd.f32 %v931, %v933
        %v936 = vmul.f32 %v653, %v653
        %v937 = vmul.f32 %v658, %v658
        %v938 = vadd.f32 %v934, %v936
        %v939 = vadd.f32 %v935, %v937
        %v940 = vmax.f32 %v938, 1e-08
        %v941 = vmax.f32 %v939, 1e-08
        %v942 = vrsqrt.pop %v940
        %v943 = vmul.f32 %v940, %v942
        %vm944 = vcmp.eq.f32.partialorder %v940, inf
        %v945 = vsel %vm944, %v940, %v943
        %vm946 = vcmp.eq.f32.partialorder %v940, 0.0
        %v947 = vand.u32 %v940, 2147483648
        %v948 = vsel %vm946, %v947, %v945
        %v949 = vrsqrt.pop %v941
        %v950 = vmul.f32 %v941, %v949
        %vm951 = vcmp.eq.f32.partialorder %v941, inf
        %v952 = vsel %vm951, %v941, %v950
        %vm953 = vcmp.eq.f32.partialorder %v941, 0.0
        %v954 = vand.u32 %v941, 2147483648
        %v955 = vsel %vm953, %v954, %v952
        %v956 = vxor.u32 %v948, 2147483648
        %v957 = vxor.u32 %v955, 2147483648
        %v958 = vmul.f32 %v956, 1.442695
        %v959 = vpow.pop %v958
        %v960 = vmul.f32 %v957, 1.442695
        %v961 = vpow.pop %v960
        %v962 = vadd.f32 %v959, 1.0
        %v963 = vadd.f32 %v961, 1.0
        %v964 = vrcp.pop %v962
        %v965 = vmul.f32 1.0, %v964
        %v966 = vrcp.pop %v963
        %v967 = vmul.f32 1.0, %v966
        %v968 = vmul.f32 %v477, %v965
        %v969 = vmul.f32 %v482, %v967
        %970 = vst [vmem:[%s380] sm:$0xff] %v968
        %971 = vst [vmem:[%s380 + $0x8] sm:$0xff] %v969
        %v972 = vmul.f32 %v565, %v965
        %v973 = vmul.f32 %v570, %v967
        %s974 = scalar_lea.vmem %s380, 16 [#allocation7]
        %975 = vst [vmem:[%s974] sm:$0xff] %v972
        %976 = vst [vmem:[%s974 + $0x8] sm:$0xff] %v973
        %v977 = vmul.f32 %v653, %v965
        %v978 = vmul.f32 %v658, %v967
        %s979 = scalar_lea.vmem %s380, 32 [#allocation7]
        %980 = vst [vmem:[%s979] sm:$0xff] %v977
        %981 = vst [vmem:[%s979 + $0x8] sm:$0xff] %v978
        %s982 = sand.u32 %s172, 1
        %s983 = scalar_lea.sflag [#allocation4], %s982
        %s984 = sand.u32 %s172, 1
        %s985 = smul.addr %s984, 32
        %s986 = scalar_lea.vmem [#allocation6], %s985
        %s987 = sand.u32 %s198, 1
        %s988 = scalar_lea.sflag [#allocation8], %s987
        %s989 = sand.u32 %s198, 1
        %s990 = smul.addr %s989, 48
        %s991 = scalar_lea.vmem [#allocation7], %s990
        // Predicated region
        $region87: #{tpu_custom_call.1} parent=77 // pred_check
          %p992 = pneg %p182
        $region88: #{tpu_custom_call.1} parent=77 // pred_check_branch
          %994 = sbr.rel (%p992) target = $region90
        $region89: #{tpu_custom_call.1} parent=77 // pred_region
          %s996 = ssub.s32 512, 512
          %997 = vsyncadd %s983, %s996
          %s998 = smul.addr %s28, 128
          %s999 = scalar_lea.hbm %s6, %s998
          %s1000 = sshll.u32 %s986, 4
          %s1001 = int_to_ptr.vmem [resolvable:$true] %s1000
          %1006 = dma.vmem_to_hbm [thread:$0]  %s1001, 512, %s999, %s983, 128, 256, 8
        $region90: #{tpu_custom_call.1} parent=77 // pred_fallthru
          _
        // Predicated region
        $region91: #{tpu_custom_call.1} parent=77 // pred_check
          %p1007 = pneg %p208
        $region92: #{tpu_custom_call.1} parent=77 // pred_check_branch
          %1009 = sbr.rel (%p1007) target = $region94
        $region93: #{tpu_custom_call.1} parent=77 // pred_region
          %s1011 = ssub.s32 768, 768
          %1012 = vsyncadd %s988, %s1011
          %s1013 = smul.addr %s28, 128
          %s1014 = scalar_lea.hbm %s7, %s1013
          %s1015 = sshll.u32 %s991, 4
          %s1016 = int_to_ptr.vmem [resolvable:$true] %s1015
          %1021 = dma.vmem_to_hbm [thread:$0]  %s1016, 768, %s1014, %s988, 128, 256, 8
        $region94: #{tpu_custom_call.1} parent=77 // pred_fallthru
          _
      $region78: #{tpu_custom_call.1} parent=5 // pred_fallthru
        _
      %p1022 = scmp.le.s32.totalorder 2, %s23
      // Predicated region
      $region95: #{tpu_custom_call.1} parent=5 // pred_check
        %p1023 = pneg %p1022
      $region96: #{tpu_custom_call.1} parent=5 // pred_check_branch
        %1025 = sbr.rel (%p1023) target = $region98
      $region97: #{tpu_custom_call.1} parent=5 // pred_region
        %s1026 = ssub.s32 %s23, 2
        // Predicated region
        $region99: #{tpu_custom_call.1} parent=97 // pred_check
          %p1027 = pneg %p188
        $region100: #{tpu_custom_call.1} parent=97 // pred_check_branch
          %1029 = sbr.rel (%p1027) target = $region102
        $region101: #{tpu_custom_call.1} parent=97 // pred_region
          %s1030 = sand.u32 %s173, 1
          %s1031 = scalar_lea.sflag [#allocation4], %s1030
          %s1032 = sand.u32 %s173, 1
          %s1033 = smul.addr %s1032, 32
          %s1034 = scalar_lea.vmem [#allocation6], %s1033
          %1035 = dma.done %s1031, 512
        $region102: #{tpu_custom_call.1} parent=97 // pred_fallthru
          _
        // Predicated region
        $region103: #{tpu_custom_call.1} parent=97 // pred_check
          %p1036 = pneg %p214
        $region104: #{tpu_custom_call.1} parent=97 // pred_check_branch
          %1038 = sbr.rel (%p1036) target = $region106
        $region105: #{tpu_custom_call.1} parent=97 // pred_region
          %s1039 = sand.u32 %s199, 1
          %s1040 = scalar_lea.sflag [#allocation8], %s1039
          %s1041 = sand.u32 %s199, 1
          %s1042 = smul.addr %s1041, 48
          %s1043 = scalar_lea.vmem [#allocation7], %s1042
          %1044 = dma.done %s1040, 768
        $region106: #{tpu_custom_call.1} parent=97 // pred_fallthru
          _
      $region98: #{tpu_custom_call.1} parent=5 // pred_fallthru
        _
    $region6: #{tpu_custom_call.1} parent=1 // loop_footer
      %s27 = sadd.s32 1, %s23
    $region7: #{tpu_custom_call.1} parent=1 // loop_footer_branch
      %22 = sbr.rel target = $region3
    $region8: #{tpu_custom_call.1} parent=1 // loop_exit
      _
    %1045 = vsyncpa [#allocation3], 1
    %s1046 = scalar_lea.sflag [#allocation3], 1
    %1047 = vsyncpa %s1046, 1
    %1048 = vsyncpa [#allocation4], 1
    %s1049 = scalar_lea.sflag [#allocation4], 1
    %1050 = vsyncpa %s1049, 1
    %1051 = vsyncpa [#allocation8], 1
    %s1052 = scalar_lea.sflag [#allocation8], 1
    %1053 = vsyncpa %s1052, 1

</llo_original>
